<compile_context>
chip_gen: v6e
topology: v6e:2x2x1
jax: 0.10.0
libtpu: 0.0.40
codegen_flags: <defaults>
</compile_context>

<pallas_src>
import jax
import jax.numpy as jnp
from jax.experimental import pallas as pl
from jax.experimental.pallas import tpu as pltpu


def _round_up(x, m):
    return ((x + m - 1) // m) * m


def _round_down(x, m):
    return (x // m) * m


def _kernel_bias(x_ref, w_ref, b_ref, o_ref):
    # Shapes either match exactly (3-D path) or w/b broadcast over sublanes
    # (2-D path, w/b are (1, TP)).
    o_ref[...] = (w_ref[...] * x_ref[...] + b_ref[...]).astype(o_ref.dtype)


def _kernel_nobias(x_ref, w_ref, o_ref):
    o_ref[...] = (w_ref[...] * x_ref[...]).astype(o_ref.dtype)


_X_BLOCK_BYTES = 4 << 20  # ~4 MiB of x per block: safe/fast on v5e/v6e/v7x.


def pointwise_linear(x, weight, bias=None):
    """y = weight[None] * x (+ bias[None]); weight/bias shape == x.shape[1:]."""
    assert weight.shape == tuple(x.shape[1:]), (weight.shape, x.shape)
    orig_shape = x.shape
    n = x.shape[0]
    p = 1
    for d in x.shape[1:]:
        p *= d

    # Match PyTorch broadcasting numerics: promote, never downcast the params.
    out_dtype = jnp.promote_types(x.dtype, weight.dtype)
    if bias is not None:
        out_dtype = jnp.promote_types(out_dtype, bias.dtype)
    itemsize = jnp.dtype(out_dtype).itemsize
    sub = max(8, 32 // itemsize)  # sublane multiple: 8 f32 / 16 bf16 / 32 int8

    x = x.astype(out_dtype)
    weight = weight.astype(out_dtype)
    if bias is not None:
        bias = bias.astype(out_dtype)

    n_params = 2 if bias is not None else 1
    cost = pl.CostEstimate(
        flops=n_params * n * p,
        transcendentals=0,
        bytes_accessed=(2 * n * p + n_params * p) * itemsize,
    )

    # ------------------------------------------------------------------
    # Layout / tiling selection.
    # ------------------------------------------------------------------
    p2 = 128
    p1 = p // p2
    use_3d = (n < 8) and (p % p2 == 0) and (p1 >= 8)

    if use_3d:
        # x -> (N, P1, 128); weight/bias -> (P1, 128).  All blocks (TP1, 128).
        x_in = x.reshape(n, p1, p2)
        w_in = weight.reshape(p1, p2)
        b_in = bias.reshape(p1, p2) if bias is not None else None

        tp1_budget = max(sub, _round_down(_X_BLOCK_BYTES // (p2 * itemsize), sub))
        tp1 = p1 if p1 <= tp1_budget else tp1_budget
        # v7x dual-TC: keep >=2 grid blocks, but only for non-trivial sizes.
        if n * pl.cdiv(p1, tp1) == 1 and n * p * itemsize >= (2 << 20) and tp1 > sub:
            tp1 = _round_up(pl.cdiv(p1, 2), sub)

        blk = tp1 * p2 * itemsize
        footprint = 2 * (2 * blk + n_params * blk)  # x, out, w(, b) double-buffered

        grid = (pl.cdiv(p1, tp1), n)  # batch innermost -> w/b stay resident
        x_spec = pl.BlockSpec((None, tp1, p2), lambda ip, b: (b, ip, 0))
        w_spec = pl.BlockSpec((tp1, p2), lambda ip, b: (ip, 0))
        b_spec = w_spec
        o_spec = pl.BlockSpec((None, tp1, p2), lambda ip, b: (b, ip, 0))
        out_shape = jax.ShapeDtypeStruct((n, p1, p2), out_dtype)
    else:
        # x -> (N, P); weight/bias -> (1, P).
        x_in = x.reshape(n, p)
        w_in = weight.reshape(1, p)
        b_in = bias.reshape(1, p) if bias is not None else None

        tn = n if n <= 256 else 256  # 256 is a multiple of 8/16/32
        tp_budget = max(128, _round_down(_X_BLOCK_BYTES // (tn * itemsize), 128))
        tp = min(_round_up(p, 128), tp_budget)
        # v7x dual-TC: keep >=2 grid blocks, but only for non-trivial sizes,
        # preferring a batch split over a padded lane split.
        if pl.cdiv(n, tn) * pl.cdiv(p, tp) == 1 and n * p * itemsize >= (2 << 20):
            if n >= 2 * sub:
                tn = _round_up(pl.cdiv(n, 2), sub)
            elif tp >= 256:
                tp = _round_up(pl.cdiv(p, 2), 128)

        footprint = 2 * (2 * tn * tp + n_params * tp) * itemsize

        grid = (pl.cdiv(p, tp), pl.cdiv(n, tn))  # batch innermost -> w/b resident
        x_spec = pl.BlockSpec((tn, tp), lambda ip, ib: (ib, ip))
        w_spec = pl.BlockSpec((1, tp), lambda ip, ib: (0, ip))
        b_spec = w_spec
        o_spec = pl.BlockSpec((tn, tp), lambda ip, ib: (ib, ip))
        out_shape = jax.ShapeDtypeStruct((n, p), out_dtype)

    # Explicit scoped-VMEM budget derived from the real pipelined footprint
    # (stays well under v7x's 64 MiB/TC and v5e/v6e's 128 MiB physical).
    vmem_limit = int(max(32 << 20, footprint + (8 << 20)))

    cparams = pltpu.CompilerParams(
        dimension_semantics=("parallel", "parallel"),
        vmem_limit_bytes=vmem_limit,
    )

    if bias is not None:
        in_specs = [x_spec, w_spec, b_spec]
        operands = (x_in, w_in, b_in)
        kernel = _kernel_bias
    else:
        in_specs = [x_spec, w_spec]
        operands = (x_in, w_in)
        kernel = _kernel_nobias

    y = pl.pallas_call(
        kernel,
        out_shape=out_shape,
        grid_spec=pltpu.PrefetchScalarGridSpec(
            num_scalar_prefetch=0,
            grid=grid,
            in_specs=in_specs,
            out_specs=o_spec,
        ),
        compiler_params=cparams,
        cost_estimate=cost,
    )(*operands)

    return y.reshape(orig_shape)


class PointwiseLinearLayer:
    """JAX/Pallas port of scFNN PointwiseLinearLayer."""

    def __init__(self, shape, low=-1.0, high=1.0, bias=True, key=None):
        if key is None:
            key = jax.random.PRNGKey(0)
        # weight ~ U(low, high), bias zero-initialized (matches _reset_parameters)
        self.weight = jax.random.uniform(
            key, shape, dtype=jnp.float32, minval=low, maxval=high)
        self.bias = jnp.zeros(shape, dtype=jnp.float32) if bias else None
        self.low = low
        self.high = high

    def __call__(self, x):
        return pointwise_linear(x, self.weight, self.bias)


if __name__ == "__main__":
    key = jax.random.PRNGKey(0)
    kx, kw, kx2, kw2, kx3, kw3 = jax.random.split(key, 6)

    # 1) Small NCHW example: batch=2, channels=4, spatial=16x16 (P=1024).
    #    Exercises the 3-D (sublane-dense) path for tiny batches.
    N, C, H, W = 2, 4, 16, 16
    x = jax.random.normal(kx, (N, C, H, W), dtype=jnp.float32)
    layer = PointwiseLinearLayer((C, H, W), low=-1.0, high=1.0, bias=True, key=kw)
    y = jax.block_until_ready(layer(x))
    y_ref = layer.weight[None] * x + layer.bias[None]
    assert y.shape == x.shape
    assert jnp.allclose(y, y_ref, atol=1e-6, rtol=1e-6)

    # 2) Uneven shapes (P=273, not a multiple of 128; batch=10) + no-bias path:
    #    exercises the 2-D path with cdiv-based partial edge blocks.
    N2, C2, H2, W2 = 10, 3, 7, 13
    x2 = jax.random.normal(kx2, (N2, C2, H2, W2), dtype=jnp.float32)
    layer2 = PointwiseLinearLayer((C2, H2, W2), low=-1.0, high=1.0,
                                  bias=False, key=kw2)
    y2 = jax.block_until_ready(layer2(x2))
    y2_ref = layer2.weight[None] * x2
    assert y2.shape == x2.shape
    assert jnp.allclose(y2, y2_ref, atol=1e-6, rtol=1e-6)

    # 3) Mixed precision: bf16 activations, f32 params -> promoted f32 output
    #    (matches PyTorch broadcasting; params never downcast).
    x3 = jax.random.normal(kx3, (N, C, H, W), dtype=jnp.bfloat16)
    layer3 = PointwiseLinearLayer((C, H, W), low=-1.0, high=1.0, bias=True, key=kw3)
    y3 = jax.block_until_ready(layer3(x3))
    y3_ref = layer3.weight[None] * x3.astype(jnp.float32) + layer3.bias[None]
    assert y3.dtype == jnp.float32
    assert jnp.allclose(y3, y3_ref, atol=1e-6, rtol=1e-6)

    print("KERNEL_OK")
</pallas_src>

<mosaic_0001>
module attributes {stable_mosaic.version = 11 : i64} {
  func.func @_kernel_bias(%arg0: i32, %arg1: i32, %arg2: memref<1x8x128xf32, #tpu.memory_space<vmem>>, %arg3: memref<8x128xf32, #tpu.memory_space<vmem>>, %arg4: memref<8x128xf32, #tpu.memory_space<vmem>>, %arg5: memref<1x8x128xf32, #tpu.memory_space<vmem>>) attributes {dimension_semantics = [#tpu.dimension_semantics<parallel>, #tpu.dimension_semantics<parallel>], iteration_bounds = array<i64: 1, 2>, scalar_prefetch = 0 : i64, scratch_operands = 0 : i64, tpu.core_type = #tpu.core_type<tc>, window_params = [{transform_indices = @transform_0, window_bounds = array<i64: 1, 8, 128>}, {transform_indices = @transform_1, window_bounds = array<i64: 8, 128>}, {transform_indices = @transform_2, window_bounds = array<i64: 8, 128>}, {transform_indices = @transform_3, window_bounds = array<i64: 1, 8, 128>}]} {
    %c0 = arith.constant 0 : index
    %c0_0 = arith.constant 0 : index
    %0 = vector.load %arg3[%c0, %c0_0] : memref<8x128xf32, #tpu.memory_space<vmem>>, vector<8x128xf32>
    %c0_1 = arith.constant 0 : index
    %c0_2 = arith.constant 0 : index
    %c0_3 = arith.constant 0 : index
    %1 = vector.load %arg2[%c0_1, %c0_2, %c0_3] : memref<1x8x128xf32, #tpu.memory_space<vmem>>, vector<1x8x128xf32>
    %2 = vector.shape_cast %1 : vector<1x8x128xf32> to vector<8x128xf32>
    %3 = arith.mulf %0, %2 : vector<8x128xf32>
    %c0_4 = arith.constant 0 : index
    %c0_5 = arith.constant 0 : index
    %4 = vector.load %arg4[%c0_4, %c0_5] : memref<8x128xf32, #tpu.memory_space<vmem>>, vector<8x128xf32>
    %5 = arith.addf %3, %4 : vector<8x128xf32>
    %c0_6 = arith.constant 0 : index
    %c0_7 = arith.constant 0 : index
    %c0_8 = arith.constant 0 : index
    %6 = vector.load %arg5[%c0_6, %c0_7, %c0_8] : memref<1x8x128xf32, #tpu.memory_space<vmem>>, vector<1x8x128xf32>
    %7 = vector.shape_cast %6 : vector<1x8x128xf32> to vector<8x128xf32>
    %8 = vector.shape_cast %5 : vector<8x128xf32> to vector<1x8x128xf32>
    tpu.vector_store %arg5[%c0_6, %c0_7, %c0_8], %8 {strides = array<i32>} : memref<1x8x128xf32, #tpu.memory_space<vmem>>, vector<1x8x128xf32>,
    return
  }
  func.func @transform_0(%arg0: i32, %arg1: i32) -> (i32, i32, i32) {
    %c0_i32 = arith.constant 0 : i32
    %c0_i32_0 = arith.constant 0 : i32
    return %arg1, %arg0, %c0_i32 : i32, i32, i32
  }
  func.func @transform_1(%arg0: i32, %arg1: i32) -> (i32, i32) {
    %c0_i32 = arith.constant 0 : i32
    %c0_i32_0 = arith.constant 0 : i32
    return %arg0, %c0_i32 : i32, i32
  }
  func.func @transform_2(%arg0: i32, %arg1: i32) -> (i32, i32) {
    %c0_i32 = arith.constant 0 : i32
    %c0_i32_0 = arith.constant 0 : i32
    return %arg0, %c0_i32 : i32, i32
  }
  func.func @transform_3(%arg0: i32, %arg1: i32) -> (i32, i32, i32) {
    %c0_i32 = arith.constant 0 : i32
    %c0_i32_0 = arith.constant 0 : i32
    return %arg1, %arg0, %c0_i32 : i32, i32, i32
  }
}

</mosaic_0001>

<llo_original>
// kernel: tpu_custom_call.1
$region0: #{tpu_custom_call.1}
  #allocation0 [shape = 'u32[]', space=smem, size = 0x4, offset = 0x4, fixed_abs, tag = 'smem constant byte address 0x4 - core index']
  #allocation1 [shape = 'u32[144,128]{1,0:T(1,128)}', space=vmem, size = 0x12000, scoped, tag = 'internal scratch']
  %s0 = inlined_call_operand.hbm [shape: f32[2,8,128], index: 0, kind: input, shape index: {}]
  %s1 = inlined_call_operand.hbm [shape: f32[8,128], index: 1, kind: input, shape index: {}]
  %s2 = inlined_call_operand.hbm [shape: f32[8,128], index: 2, kind: input, shape index: {}]
  %s3 = inlined_call_operand.hbm [shape: f32[2,8,128], index: 3, kind: output, shape index: {}]
  %s4 = sld [smem:[#allocation0]]
  $region57: #{tpu_custom_call.1} parent=0
    _
  %s6 = ssub.s32 1, %s4
  %s7 = scalar_select 0, %s6, %s4
  $region1: #{tpu_custom_call.1} parent=0
    #allocation2 [shape = 'u8[8192]{0}', space=vmem, size = 0x2000, scoped, tag = 'input window, operand 0']
    #allocation3 [shape = 's32[2]{0}', space=sflag, size = 0x8, scoped, tag = 'scoped memory for tpu_custom_call.1']
    #allocation4 [shape = 's32[2]{0}', space=sflag, size = 0x8, scoped, tag = 'scoped memory for tpu_custom_call.1']
    #allocation5 [shape = 'u8[4096]{0}', space=vmem, size = 0x1000, scoped, tag = 'input window, operand 1, single buffered']
    #allocation6 [shape = 's32[1]{0}', space=sflag, size = 0x4, scoped, tag = 'scoped memory for tpu_custom_call.1']
    #allocation7 [shape = 'u8[4096]{0}', space=vmem, size = 0x1000, scoped, tag = 'input window, operand 2, single buffered']
    #allocation8 [shape = 'u8[8192]{0}', space=vmem, size = 0x2000, scoped, tag = 'output window, operand 0']
    %8 = vsyncpa [#allocation3], 0
    %s9 = scalar_lea.sflag [#allocation3], 1
    %10 = vsyncpa %s9, 0
    %11 = vsyncpa [#allocation6], 0
    %12 = vsyncpa [#allocation4], 0
    %s13 = scalar_lea.sflag [#allocation4], 1
    %14 = vsyncpa %s13, 0
    loop: start=0, step=1, limit=4
    $region2: #{tpu_custom_call.1} parent=1 // loop_pre_header
      _
    $region3: #{tpu_custom_call.1} parent=1 // loop_header
      %s16 = sphi 0, %s20
      %p17 = scmp.ge.s32.totalorder %s16, 4
      %s23 = sphi 0, %s35
      %s24 = sphi 0, %s31
      %s25 = sphi 0, %s23
      %s26 = sphi 0, %s24
      %s27 = sphi 0, %s25
      %s28 = sphi 0, %s26
      %s40 = sphi 0, %s42
      %s43 = sphi 0, %s40
      %s44 = sphi 0, %s43
      %s60 = sphi 0, %s44
      %s66 = sphi 0, %s68
      %s69 = sphi 0, %s66
      %s70 = sphi 0, %s69
      %s86 = sphi 0, %s70
      %s92 = sphi 0, %s94
      %s95 = sphi 0, %s92
      %s96 = sphi 0, %s95
      %s112 = sphi 0, %s96
      %s120 = sphi 0, %s122
      %s123 = sphi 0, %s120
      %s124 = sphi 0, %s123
      %s140 = sphi 0, %s124
    $region4: #{tpu_custom_call.1} parent=1 // loop_header_branch
      %19 = sbr.rel (%p17) target = $region8
    $region5: #{tpu_custom_call.1} parent=1 // loop_body
      %s21 = ssub.s32 %s16, 1
      %s22 = ssub.s32 %s16, 2
      %s29 = sadd.s32 1, %s24
      %p30 = scmp.ge.s32.totalorder %s29, 2
      %s31 = scalar_select %p30, 0, %s29
      %s32 = sadd.s32 1, %s23
      %s33 = scalar_select %p30, %s32, %s23
      %p34 = scmp.ge.s32.totalorder %s33, 1
      %s35 = scalar_select %p34, 0, %s33
      %s36 = ssub.s32 %s24, %s31
      %s37 = ssub.s32 %s23, %s35
      %s38 = sor.u32 %s36, %s37
      %p39 = scmp.eq.s32.totalorder %s38, 0
      %s41 = sadd.s32 %s40, 1
      %s42 = scalar_select %p39, %s40, %s41
      %p45 = pneg %p39
      %p46 = scmp.eq.s32.totalorder %s16, 1
      %p47 = por %p45, %p46
      %p48 = scmp.ne.s32.totalorder %s40, %s43
      %p49 = scmp.eq.s32.totalorder %s16, 0
      %p50 = por %p48, %p49
      %p51 = scmp.ne.s32.totalorder %s40, %s43
      %p52 = scmp.eq.s32.totalorder %s21, 1
      %p53 = por %p51, %p52
      %p54 = scmp.ne.s32.totalorder %s43, %s44
      %p55 = scmp.eq.s32.totalorder %s21, 0
      %p56 = por %p54, %p55
      %p57 = scmp.ne.s32.totalorder %s43, %s44
      %p58 = scmp.eq.s32.totalorder %s22, 1
      %p59 = por %p57, %p58
      %p61 = scmp.ne.s32.totalorder %s44, %s60
      %p62 = scmp.eq.s32.totalorder %s22, 0
      %p63 = por %p61, %p62
      %s64 = ssub.s32 %s23, %s35
      %p65 = scmp.eq.s32.totalorder %s64, 0
      %s67 = sadd.s32 %s66, 1
      %s68 = scalar_select %p65, %s66, %s67
      %p71 = pneg %p65
      %p72 = scmp.eq.s32.totalorder %s16, 1
      %p73 = por %p71, %p72
      %p74 = scmp.ne.s32.totalorder %s66, %s69
      %p75 = scmp.eq.s32.totalorder %s16, 0
      %p76 = por %p74, %p75
      %p77 = scmp.ne.s32.totalorder %s66, %s69
      %p78 = scmp.eq.s32.totalorder %s21, 1
      %p79 = por %p77, %p78
      %p80 = scmp.ne.s32.totalorder %s69, %s70
      %p81 = scmp.eq.s32.totalorder %s21, 0
      %p82 = por %p80, %p81
      %p83 = scmp.ne.s32.totalorder %s69, %s70
      %p84 = scmp.eq.s32.totalorder %s22, 1
      %p85 = por %p83, %p84
      %p87 = scmp.ne.s32.totalorder %s70, %s86
      %p88 = scmp.eq.s32.totalorder %s22, 0
      %p89 = por %p87, %p88
      %s90 = ssub.s32 %s23, %s35
      %p91 = scmp.eq.s32.totalorder %s90, 0
      %s93 = sadd.s32 %s92, 1
      %s94 = scalar_select %p91, %s92, %s93
      %p97 = pneg %p91
      %p98 = scmp.eq.s32.totalorder %s16, 1
      %p99 = por %p97, %p98
      %p100 = scmp.ne.s32.totalorder %s92, %s95
      %p101 = scmp.eq.s32.totalorder %s16, 0
      %p102 = por %p100, %p101
      %p103 = scmp.ne.s32.totalorder %s92, %s95
      %p104 = scmp.eq.s32.totalorder %s21, 1
      %p105 = por %p103, %p104
      %p106 = scmp.ne.s32.totalorder %s95, %s96
      %p107 = scmp.eq.s32.totalorder %s21, 0
      %p108 = por %p106, %p107
      %p109 = scmp.ne.s32.totalorder %s95, %s96
      %p110 = scmp.eq.s32.totalorder %s22, 1
      %p111 = por %p109, %p110
      %p113 = scmp.ne.s32.totalorder %s96, %s112
      %p114 = scmp.eq.s32.totalorder %s22, 0
      %p115 = por %p113, %p114
      %s116 = ssub.s32 %s24, %s31
      %s117 = ssub.s32 %s23, %s35
      %s118 = sor.u32 %s116, %s117
      %p119 = scmp.eq.s32.totalorder %s118, 0
      %s121 = sadd.s32 %s120, 1
      %s122 = scalar_select %p119, %s120, %s121
      %p125 = pneg %p119
      %p126 = scmp.eq.s32.totalorder %s16, 1
      %p127 = por %p125, %p126
      %p128 = scmp.ne.s32.totalorder %s120, %s123
      %p129 = scmp.eq.s32.totalorder %s16, 0
      %p130 = por %p128, %p129
      %p131 = scmp.ne.s32.totalorder %s120, %s123
      %p132 = scmp.eq.s32.totalorder %s21, 1
      %p133 = por %p131, %p132
      %p134 = scmp.ne.s32.totalorder %s123, %s124
      %p135 = scmp.eq.s32.totalorder %s21, 0
      %p136 = por %p134, %p135
      %p137 = scmp.ne.s32.totalorder %s123, %s124
      %p138 = scmp.eq.s32.totalorder %s22, 1
      %p139 = por %p137, %p138
      %p141 = scmp.ne.s32.totalorder %s124, %s140
      %p142 = scmp.eq.s32.totalorder %s22, 0
      %p143 = por %p141, %p142
      %p144 = scmp.le.s32.totalorder 1, %s16
      %p145 = scmp.lt.s32.totalorder %s16, 3
      %p146 = pnand %p144, %p145
      %p147 = pneg %p146
      // Predicated region
      $region9: #{tpu_custom_call.1} parent=5 // pred_check
        _
      $region10: #{tpu_custom_call.1} parent=5 // pred_check_branch
        %149 = sbr.rel (%p146) target = $region12
      $region11: #{tpu_custom_call.1} parent=5 // pred_region
        %s150 = ssub.s32 %s16, 1
        // Predicated region
        $region13: #{tpu_custom_call.1} parent=11 // pred_check
          %p151 = pneg %p82
        $region14: #{tpu_custom_call.1} parent=11 // pred_check_branch
          %153 = sbr.rel (%p151) target = $region16
        $region15: #{tpu_custom_call.1} parent=11 // pred_region
          %s155 = ssub.s32 128, 128
          %156 = vsyncadd [#allocation6], %s155
          %s157 = smul.addr %s25, 128
          %s158 = scalar_lea.hbm %s1, %s157
          %s160 = sshll.u32 [#allocation5], 4
          %s161 = int_to_ptr.vmem [resolvable:$true] %s160
          %163 = dma.hbm_to_vmem [thread:$0]  %s158, 128, %s161, [#allocation6]
        $region16: #{tpu_custom_call.1} parent=11 // pred_fallthru
          _
        // Predicated region
        $region17: #{tpu_custom_call.1} parent=11 // pred_check
          %p164 = pneg %p108
        $region18: #{tpu_custom_call.1} parent=11 // pred_check_branch
          %166 = sbr.rel (%p164) target = $region20
        $region19: #{tpu_custom_call.1} parent=11 // pred_region
          %s168 = ssub.s32 128, 128
          %169 = vsyncadd [#allocation6], %s168
          %s170 = smul.addr %s25, 128
          %s171 = scalar_lea.hbm %s2, %s170
          %s173 = sshll.u32 [#allocation7], 4
          %s174 = int_to_ptr.vmem [resolvable:$true] %s173
          %176 = dma.hbm_to_vmem [thread:$0]  %s171, 128, %s174, [#allocation6]
        $region20: #{tpu_custom_call.1} parent=11 // pred_fallthru
          _
      $region12: #{tpu_custom_call.1} parent=5 // pred_fallthru
        _
      %p177 = scmp.lt.s32.totalorder %s16, 2
      // Predicated region
      $region21: #{tpu_custom_call.1} parent=5 // pred_check
        %p178 = pneg %p177
      $region22: #{tpu_custom_call.1} parent=5 // pred_check_branch
        %180 = sbr.rel (%p178) target = $region24
      $region23: #{tpu_custom_call.1} parent=5 // pred_region
        // Predicated region
        $region25: #{tpu_custom_call.1} parent=23 // pred_check
          %p181 = pneg %p50
        $region26: #{tpu_custom_call.1} parent=23 // pred_check_branch
          %183 = sbr.rel (%p181) target = $region28
        $region27: #{tpu_custom_call.1} parent=23 // pred_region
          %s184 = sand.u32 %s40, 1
          %s185 = scalar_lea.sflag [#allocation3], %s184
          %s186 = sand.u32 %s40, 1
          %s187 = smul.addr %s186, 8
          %s188 = scalar_lea.vmem [#allocation2], %s187
          %s190 = ssub.s32 128, 128
          %191 = vsyncadd %s185, %s190
          %s192 = sadd.s32 %s23, %s24
          %s193 = smul.addr %s192, 128
          %s194 = scalar_lea.hbm %s0, %s193
          %s196 = sshll.u32 %s188, 4
          %s197 = int_to_ptr.vmem [resolvable:$true] %s196
          %199 = dma.hbm_to_vmem [thread:$0]  %s194, 128, %s197, %s185
        $region28: #{tpu_custom_call.1} parent=23 // pred_fallthru
          _
      $region24: #{tpu_custom_call.1} parent=5 // pred_fallthru
        _
      %p200 = scmp.le.s32.totalorder 1, %s16
      %p201 = scmp.lt.s32.totalorder %s16, 3
      %p202 = pnand %p200, %p201
      %p203 = pneg %p202
      // Predicated region
      $region29: #{tpu_custom_call.1} parent=5 // pred_check
        _
      $region30: #{tpu_custom_call.1} parent=5 // pred_check_branch
        %205 = sbr.rel (%p202) target = $region32
      $region31: #{tpu_custom_call.1} parent=5 // pred_region
        %s206 = ssub.s32 %s16, 1
        %s207 = sand.u32 %s43, 1
        %s208 = scalar_lea.sflag [#allocation3], %s207
        %s209 = sand.u32 %s43, 1
        %s210 = smul.addr %s209, 8
        %s211 = scalar_lea.vmem [#allocation2], %s210
        // Predicated region
        $region33: #{tpu_custom_call.1} parent=31 // pred_check
          %p212 = pneg %p56
        $region34: #{tpu_custom_call.1} parent=31 // pred_check_branch
          %214 = sbr.rel (%p212) target = $region36
        $region35: #{tpu_custom_call.1} parent=31 // pred_region
          %215 = dma.done %s208, 128
        $region36: #{tpu_custom_call.1} parent=31 // pred_fallthru
          _
        // Predicated region
        $region37: #{tpu_custom_call.1} parent=31 // pred_check
          %p216 = pneg %p82
        $region38: #{tpu_custom_call.1} parent=31 // pred_check_branch
          %218 = sbr.rel (%p216) target = $region40
        $region39: #{tpu_custom_call.1} parent=31 // pred_region
          %219 = dma.done [#allocation6], 128
        $region40: #{tpu_custom_call.1} parent=31 // pred_fallthru
          _
        // Predicated region
        $region41: #{tpu_custom_call.1} parent=31 // pred_check
          %p220 = pneg %p108
        $region42: #{tpu_custom_call.1} parent=31 // pred_check_branch
          %222 = sbr.rel (%p220) target = $region44
        $region43: #{tpu_custom_call.1} parent=31 // pred_region
          %223 = dma.done [#allocation6], 128
        $region44: #{tpu_custom_call.1} parent=31 // pred_fallthru
          _
        %s224 = sand.u32 %s43, 1
        %s225 = scalar_lea.sflag [#allocation3], %s224
        %s226 = sand.u32 %s43, 1
        %s227 = smul.addr %s226, 8
        %s228 = scalar_lea.vmem [#allocation2], %s227
        %p229 = pneg %p56
        %p230 = pneg %p53
        %p231 = pneg %p82
        %p232 = pneg %p79
        %p233 = pneg %p108
        %p234 = pneg %p105
        %p235 = pneg %p136
        %p236 = pneg %p133
        %s237 = sand.u32 %s123, 1
        %s238 = scalar_lea.sflag [#allocation4], %s237
        %s239 = sand.u32 %s123, 1
        %s240 = smul.addr %s239, 8
        %s241 = scalar_lea.vmem [#allocation8], %s240
        %v242 = vld [vmem:[#allocation5] sm:$0xff]
        %v243 = vld [vmem:[%s211] sm:$0xff]
        %v244 = vmul.f32 %v242, %v243
        %v245 = vld [vmem:[#allocation7] sm:$0xff]
        %v246 = vadd.f32 %v244, %v245
        %247 = vst [vmem:[%s241] sm:$0xff] %v246
        %s248 = sand.u32 %s123, 1
        %s249 = scalar_lea.sflag [#allocation4], %s248
        %s250 = sand.u32 %s123, 1
        %s251 = smul.addr %s250, 8
        %s252 = scalar_lea.vmem [#allocation8], %s251
        // Predicated region
        $region45: #{tpu_custom_call.1} parent=31 // pred_check
          %p253 = pneg %p133
        $region46: #{tpu_custom_call.1} parent=31 // pred_check_branch
          %255 = sbr.rel (%p253) target = $region48
        $region47: #{tpu_custom_call.1} parent=31 // pred_region
          %s257 = ssub.s32 128, 128
          %258 = vsyncadd %s249, %s257
          %s259 = sadd.s32 %s25, %s26
          %s260 = smul.addr %s259, 128
          %s261 = scalar_lea.hbm %s3, %s260
          %s263 = sshll.u32 %s252, 4
          %s264 = int_to_ptr.vmem [resolvable:$true] %s263
          %266 = dma.vmem_to_hbm [thread:$0]  %s264, 128, %s261, %s249
        $region48: #{tpu_custom_call.1} parent=31 // pred_fallthru
          _
      $region32: #{tpu_custom_call.1} parent=5 // pred_fallthru
        _
      %p267 = scmp.le.s32.totalorder 2, %s16
      // Predicated region
      $region49: #{tpu_custom_call.1} parent=5 // pred_check
        %p268 = pneg %p267
      $region50: #{tpu_custom_call.1} parent=5 // pred_check_branch
        %270 = sbr.rel (%p268) target = $region52
      $region51: #{tpu_custom_call.1} parent=5 // pred_region
        %s271 = ssub.s32 %s16, 2
        // Predicated region
        $region53: #{tpu_custom_call.1} parent=51 // pred_check
          %p272 = pneg %p139
        $region54: #{tpu_custom_call.1} parent=51 // pred_check_branch
          %274 = sbr.rel (%p272) target = $region56
        $region55: #{tpu_custom_call.1} parent=51 // pred_region
          %s275 = sand.u32 %s124, 1
          %s276 = scalar_lea.sflag [#allocation4], %s275
          %s277 = sand.u32 %s124, 1
          %s278 = smul.addr %s277, 8
          %s279 = scalar_lea.vmem [#allocation8], %s278
          %280 = dma.done %s276, 128
        $region56: #{tpu_custom_call.1} parent=51 // pred_fallthru
          _
      $region52: #{tpu_custom_call.1} parent=5 // pred_fallthru
        _
    $region6: #{tpu_custom_call.1} parent=1 // loop_footer
      %s20 = sadd.s32 1, %s16
    $region7: #{tpu_custom_call.1} parent=1 // loop_footer_branch
      %15 = sbr.rel target = $region3
    $region8: #{tpu_custom_call.1} parent=1 // loop_exit
      _
    %281 = vsyncpa [#allocation3], 1
    %s282 = scalar_lea.sflag [#allocation3], 1
    %283 = vsyncpa %s282, 1
    %284 = vsyncpa [#allocation6], 1
    %285 = vsyncpa [#allocation4], 1
    %s286 = scalar_lea.sflag [#allocation4], 1
    %287 = vsyncpa %s286, 1

</llo_original>
